<compile_context>
chip_gen: v7x
topology: tpu7x:2x2x1
jax: 0.10.0
libtpu: 0.0.40
codegen_flags: <defaults>
</compile_context>

<pallas_src>
import jax
import jax.numpy as jnp
import numpy as np
from jax.experimental import pallas as pl
from jax.experimental.pallas import tpu as pltpu


# ----------------------------------------------------------------------------
# Module hyper-parameter helper (mirrors SEModule._round_width)
# ----------------------------------------------------------------------------
def round_width(width, multiplier, min_width=8, divisor=8):
    width *= multiplier
    min_width = min_width or divisor
    width_out = max(min_width, int(width + divisor / 2) // divisor * divisor)
    if width_out < 0.9 * width:
        width_out += divisor
    return int(width_out)


# ----------------------------------------------------------------------------
# Pallas kernels
# ----------------------------------------------------------------------------
def _excite_kernel(pooled_ref, w1_ref, b1_ref, w2_ref, b2_ref, s_ref):
    """s = sigmoid(fc2(relu(fc1(pooled)))) for all batches at once.

    pooled: (N, C_in)  w1t: (C_in, B)  b1: (1, B)  w2t: (B, C_out)  b2: (1, C_out)
    """
    h = jnp.dot(pooled_ref[...], w1_ref[...],
                preferred_element_type=jnp.float32) + b1_ref[...]
    h = jnp.maximum(h, 0.0)
    z = jnp.dot(h, w2_ref[...],
                preferred_element_type=jnp.float32) + b2_ref[...]
    s_ref[...] = jax.nn.sigmoid(z).astype(s_ref.dtype)


def _se_res_kernel(x_ref, w_ref, b_ref, o_ref):
    """Residual-conv branch with the gate pre-folded: out = (wr*s) @ x + (br*s).

    x: (1, C_in, THW)  w: (1, C_out, C_in)  b: (1, C_out, 1)  o: (1, C_out, THW)
    """
    y = jnp.dot(w_ref[0], x_ref[0], preferred_element_type=jnp.float32) + b_ref[0]
    o_ref[0] = y.astype(o_ref.dtype)


def _se_identity_kernel(x_ref, s_ref, o_ref):
    """Identity branch: out = x * s (per-channel gate broadcast over HW lanes)."""
    o_ref[0] = (x_ref[0] * s_ref[0]).astype(o_ref.dtype)


# ----------------------------------------------------------------------------
# Wrapper
# ----------------------------------------------------------------------------
def _pick_hw_tile(hw):
    # Prefer ~512-wide lane tiles (measured sweet spot for mem-bound streaming);
    # fall back to a single full-HW block when HW has no multiple-of-128 divisor.
    for t in (512, 1024, 256, 128):
        if hw % t == 0:
            return t
    return hw


def se_module_forward(x_nchw, params, in_channels, out_channels):
    """SEModule forward. x_nchw: (N, C_in, H, W) float32 -> (N, C_out, H, W)."""
    N, C, H, W = x_nchw.shape
    assert C == in_channels
    HW = H * W
    use_res_conv = in_channels != out_channels

    # Keep NCHW: HW goes on the 128-lane axis, channels on the sublane axis.
    x3 = x_nchw.reshape(N, C, HW)

    # ---- squeeze: global average pool (single XLA reduce over HW, f32) ----
    pooled = jnp.mean(x3, axis=2)                                 # (N, C_in)

    # ---- excitation: one tiny pallas_call for all batches at once ----
    w1t = jnp.transpose(params["w1"])                             # (C_in, B)
    b1 = params["b1"].reshape(1, -1)                              # (1, B)
    w2t = jnp.transpose(params["w2"])                             # (B, C_out)
    b2 = params["b2"].reshape(1, -1)                              # (1, C_out)
    bottleneck = w1t.shape[1]

    s = pl.pallas_call(
        _excite_kernel,
        out_shape=jax.ShapeDtypeStruct((N, out_channels), jnp.float32),
        grid_spec=pltpu.PrefetchScalarGridSpec(
            num_scalar_prefetch=0,
            grid=(1,),
            in_specs=[
                pl.BlockSpec((N, in_channels), lambda i: (0, 0)),
                pl.BlockSpec((in_channels, bottleneck), lambda i: (0, 0)),
                pl.BlockSpec((1, bottleneck), lambda i: (0, 0)),
                pl.BlockSpec((bottleneck, out_channels), lambda i: (0, 0)),
                pl.BlockSpec((1, out_channels), lambda i: (0, 0)),
            ],
            out_specs=pl.BlockSpec((N, out_channels), lambda i: (0, 0)),
        ),
    )(pooled, w1t, b1, w2t, b2)                                   # (N, C_out)

    # ---- main streaming pass: tiled over HW, both grid axes parallel ----
    thw = _pick_hw_tile(HW)
    n_hw_tiles = HW // thw

    bytes_per = x_nchw.dtype.itemsize
    block_bytes = bytes_per * (
        thw * in_channels             # x block
        + thw * out_channels          # out block
        + out_channels * in_channels  # folded weight block
        + out_channels                # folded bias block
    )
    # double-buffered in/out blocks + headroom, capped at v7x's 64 MiB VMEM.
    vmem_limit = int(min(64 << 20, max(16 << 20, 4 * block_bytes + (4 << 20))))

    compiler_params = pltpu.CompilerParams(
        dimension_semantics=("parallel", "parallel"),
        vmem_limit_bytes=vmem_limit,
    )
    out_shape = jax.ShapeDtypeStruct((N, out_channels, HW), x_nchw.dtype)

    # TODO(synk): on v6e/v7x, casting x (and the folded weight) to bfloat16 would
    # halve HBM traffic on this mem-bound pass; kept f32 here for exact parity.
    if use_res_conv:
        # Fold the sigmoid gate into the residual 1x1-conv weight & bias (tiny op).
        wr = params["wr"]                                         # (C_out, C_in)
        br = params["br"].reshape(1, -1)                          # (1, C_out)
        wr_s = wr[None, :, :] * s[:, :, None]                     # (N, C_out, C_in)
        br_s = (br * s)[:, :, None]                               # (N, C_out, 1)
        out3 = pl.pallas_call(
            _se_res_kernel,
            out_shape=out_shape,
            grid_spec=pltpu.PrefetchScalarGridSpec(
                num_scalar_prefetch=0,
                grid=(N, n_hw_tiles),
                in_specs=[
                    pl.BlockSpec((1, in_channels, thw), lambda n, t: (n, 0, t)),
                    pl.BlockSpec((1, out_channels, in_channels), lambda n, t: (n, 0, 0)),
                    pl.BlockSpec((1, out_channels, 1), lambda n, t: (n, 0, 0)),
                ],
                out_specs=pl.BlockSpec((1, out_channels, thw), lambda n, t: (n, 0, t)),
            ),
            compiler_params=compiler_params,
        )(x3, wr_s, br_s)
    else:
        s3 = s[:, :, None]                                        # (N, C, 1)
        out3 = pl.pallas_call(
            _se_identity_kernel,
            out_shape=out_shape,
            grid_spec=pltpu.PrefetchScalarGridSpec(
                num_scalar_prefetch=0,
                grid=(N, n_hw_tiles),
                in_specs=[
                    pl.BlockSpec((1, in_channels, thw), lambda n, t: (n, 0, t)),
                    pl.BlockSpec((1, in_channels, 1), lambda n, t: (n, 0, 0)),
                ],
                out_specs=pl.BlockSpec((1, out_channels, thw), lambda n, t: (n, 0, t)),
            ),
            compiler_params=compiler_params,
        )(x3, s3)

    return out3.reshape(N, out_channels, H, W)


# ----------------------------------------------------------------------------
# Pure-JAX reference (for correctness check)
# ----------------------------------------------------------------------------
def se_module_reference(x_nchw, params, in_channels, out_channels):
    pooled = jnp.mean(x_nchw, axis=(2, 3))                          # (N, C_in)
    h = jnp.maximum(pooled @ params["w1"].T + params["b1"], 0.0)    # (N, B)
    s = jax.nn.sigmoid(h @ params["w2"].T + params["b2"])           # (N, C_out)
    if in_channels != out_channels:
        res = jnp.einsum("nchw,oc->nohw", x_nchw, params["wr"]) \
              + params["br"].reshape(1, out_channels, 1, 1)
    else:
        res = x_nchw
    return res * s[:, :, None, None]


def _make_params(key, in_channels, out_channels, reduction):
    bottleneck = round_width(in_channels, reduction)
    k_w1, k_b1, k_w2, k_b2, k_wr, k_br = jax.random.split(key, 6)
    return {
        # fc1: Conv2d(in_channels, bottleneck, 1) -> weight (B, C_in), bias (B,)
        "w1": 0.1 * jax.random.normal(k_w1, (bottleneck, in_channels), jnp.float32),
        "b1": 0.1 * jax.random.normal(k_b1, (1, bottleneck), jnp.float32),
        # fc2: Conv2d(bottleneck, out_channels, 1)
        "w2": 0.1 * jax.random.normal(k_w2, (out_channels, bottleneck), jnp.float32),
        "b2": 0.1 * jax.random.normal(k_b2, (1, out_channels), jnp.float32),
        # res: Conv2d(in_channels, out_channels, 1)  (only used when in != out)
        "wr": 0.1 * jax.random.normal(k_wr, (out_channels, in_channels), jnp.float32),
        "br": 0.1 * jax.random.normal(k_br, (1, out_channels), jnp.float32),
    }


# ----------------------------------------------------------------------------
# Main
# ----------------------------------------------------------------------------
if __name__ == "__main__":
    key = jax.random.PRNGKey(0)
    k_a, k_pa, k_b, k_pb = jax.random.split(key, 4)

    # Case A: residual 1x1-conv branch (in_ch != out_ch), HW tiled -> grid=(2, 2).
    N, in_ch, out_ch, H, W = 2, 8, 16, 32, 32
    x_a = jax.random.normal(k_a, (N, in_ch, H, W), dtype=jnp.float32)
    p_a = _make_params(k_pa, in_ch, out_ch, reduction=1)
    out_a = jax.block_until_ready(se_module_forward(x_a, p_a, in_ch, out_ch))
    ref_a = se_module_reference(x_a, p_a, in_ch, out_ch)
    np.testing.assert_allclose(np.asarray(out_a), np.asarray(ref_a),
                               atol=2e-5, rtol=2e-5)

    # Case B: identity residual branch (in_ch == out_ch), single full-HW block.
    N, in_ch, out_ch, H, W = 2, 16, 16, 8, 8
    x_b = jax.random.normal(k_b, (N, in_ch, H, W), dtype=jnp.float32)
    p_b = _make_params(k_pb, in_ch, out_ch, reduction=1)
    out_b = jax.block_until_ready(se_module_forward(x_b, p_b, in_ch, out_ch))
    ref_b = se_module_reference(x_b, p_b, in_ch, out_ch)
    np.testing.assert_allclose(np.asarray(out_b), np.asarray(ref_b),
                               atol=2e-5, rtol=2e-5)

    print("KERNEL_OK")
</pallas_src>

<mosaic_0001>
module attributes {stable_mosaic.version = 11 : i64} {
  func.func @_excite_kernel(%arg0: i32, %arg1: memref<2x8xf32, #tpu.memory_space<vmem>>, %arg2: memref<8x8xf32, #tpu.memory_space<vmem>>, %arg3: memref<1x8xf32, #tpu.memory_space<vmem>>, %arg4: memref<8x16xf32, #tpu.memory_space<vmem>>, %arg5: memref<1x16xf32, #tpu.memory_space<vmem>>, %arg6: memref<2x16xf32, #tpu.memory_space<vmem>>) attributes {dimension_semantics = [#tpu.dimension_semantics<arbitrary>], iteration_bounds = array<i64: 1>, scalar_prefetch = 0 : i64, scratch_operands = 0 : i64, tpu.core_type = #tpu.core_type<tc>, window_params = [{pipeline_mode = #tpu.pipeline_mode<synchronous>, transform_indices = @transform_0, window_bounds = array<i64: 2, 8>}, {pipeline_mode = #tpu.pipeline_mode<synchronous>, transform_indices = @transform_1, window_bounds = array<i64: 8, 8>}, {pipeline_mode = #tpu.pipeline_mode<synchronous>, transform_indices = @transform_2, window_bounds = array<i64: 1, 8>}, {pipeline_mode = #tpu.pipeline_mode<synchronous>, transform_indices = @transform_3, window_bounds = array<i64: 8, 16>}, {pipeline_mode = #tpu.pipeline_mode<synchronous>, transform_indices = @transform_4, window_bounds = array<i64: 1, 16>}, {pipeline_mode = #tpu.pipeline_mode<synchronous>, transform_indices = @transform_5, window_bounds = array<i64: 2, 16>}]} {
    %c0 = arith.constant 0 : index
    %c0_0 = arith.constant 0 : index
    %0 = vector.load %arg1[%c0, %c0_0] : memref<2x8xf32, #tpu.memory_space<vmem>>, vector<2x8xf32>
    %c0_1 = arith.constant 0 : index
    %c0_2 = arith.constant 0 : index
    %1 = vector.load %arg2[%c0_1, %c0_2] : memref<8x8xf32, #tpu.memory_space<vmem>>, vector<8x8xf32>
    %cst = arith.constant dense<0.000000e+00> : vector<2x8xf32>
    %2 = tpu.matmul %0, %1, %cst {dimension_numbers = #tpu.dot_dimension_numbers<[1], [0], [0], [1], [0, 0, 1, 1], [], []>} : vector<2x8xf32>, vector<8x8xf32>, vector<2x8xf32> -> vector<2x8xf32>
    %c0_3 = arith.constant 0 : index
    %c0_4 = arith.constant 0 : index
    %3 = vector.load %arg3[%c0_3, %c0_4] : memref<1x8xf32, #tpu.memory_space<vmem>>, vector<1x8xf32>
    %4 = vector.broadcast %3 : vector<1x8xf32> to vector<2x8xf32>
    %5 = arith.addf %2, %4 : vector<2x8xf32>
    %cst_5 = arith.constant 0.000000e+00 : f32
    %6 = vector.broadcast %cst_5 : f32 to vector<2x8xf32>
    %7 = arith.maximumf %5, %6 : vector<2x8xf32>
    %c0_6 = arith.constant 0 : index
    %c0_7 = arith.constant 0 : index
    %8 = vector.load %arg4[%c0_6, %c0_7] : memref<8x16xf32, #tpu.memory_space<vmem>>, vector<8x16xf32>
    %cst_8 = arith.constant dense<0.000000e+00> : vector<2x16xf32>
    %9 = tpu.matmul %7, %8, %cst_8 {dimension_numbers = #tpu.dot_dimension_numbers<[1], [0], [0], [1], [0, 0, 1, 1], [], []>} : vector<2x8xf32>, vector<8x16xf32>, vector<2x16xf32> -> vector<2x16xf32>
    %c0_9 = arith.constant 0 : index
    %c0_10 = arith.constant 0 : index
    %10 = vector.load %arg5[%c0_9, %c0_10] : memref<1x16xf32, #tpu.memory_space<vmem>>, vector<1x16xf32>
    %11 = vector.broadcast %10 : vector<1x16xf32> to vector<2x16xf32>
    %12 = arith.addf %9, %11 : vector<2x16xf32>
    %13 = arith.negf %12 : vector<2x16xf32>
    %14 = math.exp %13 : vector<2x16xf32>
    %cst_11 = arith.constant 1.000000e+00 : f32
    %15 = vector.broadcast %cst_11 : f32 to vector<2x16xf32>
    %16 = arith.addf %15, %14 : vector<2x16xf32>
    %17 = arith.divf %15, %16 : vector<2x16xf32>
    %c0_12 = arith.constant 0 : index
    %c0_13 = arith.constant 0 : index
    %18 = vector.load %arg6[%c0_12, %c0_13] : memref<2x16xf32, #tpu.memory_space<vmem>>, vector<2x16xf32>
    tpu.vector_store %arg6[%c0_12, %c0_13], %17 {strides = array<i32>} : memref<2x16xf32, #tpu.memory_space<vmem>>, vector<2x16xf32>,
    return
  }
  func.func @transform_0(%arg0: i32) -> (i32, i32) {
    %c0_i32 = arith.constant 0 : i32
    %c0_i32_0 = arith.constant 0 : i32
    %c0_i32_1 = arith.constant 0 : i32
    return %c0_i32, %c0_i32_0 : i32, i32
  }
  func.func @transform_1(%arg0: i32) -> (i32, i32) {
    %c0_i32 = arith.constant 0 : i32
    %c0_i32_0 = arith.constant 0 : i32
    %c0_i32_1 = arith.constant 0 : i32
    return %c0_i32, %c0_i32_0 : i32, i32
  }
  func.func @transform_2(%arg0: i32) -> (i32, i32) {
    %c0_i32 = arith.constant 0 : i32
    %c0_i32_0 = arith.constant 0 : i32
    %c0_i32_1 = arith.constant 0 : i32
    return %c0_i32, %c0_i32_0 : i32, i32
  }
  func.func @transform_3(%arg0: i32) -> (i32, i32) {
    %c0_i32 = arith.constant 0 : i32
    %c0_i32_0 = arith.constant 0 : i32
    %c0_i32_1 = arith.constant 0 : i32
    return %c0_i32, %c0_i32_0 : i32, i32
  }
  func.func @transform_4(%arg0: i32) -> (i32, i32) {
    %c0_i32 = arith.constant 0 : i32
    %c0_i32_0 = arith.constant 0 : i32
    %c0_i32_1 = arith.constant 0 : i32
    return %c0_i32, %c0_i32_0 : i32, i32
  }
  func.func @transform_5(%arg0: i32) -> (i32, i32) {
    %c0_i32 = arith.constant 0 : i32
    %c0_i32_0 = arith.constant 0 : i32
    %c0_i32_1 = arith.constant 0 : i32
    return %c0_i32, %c0_i32_0 : i32, i32
  }
}

</mosaic_0001>

<llo_original>
// kernel: tpu_custom_call.1
$region0: #{tpu_custom_call.1}
  #allocation0 [shape = 'u32[]', space=smem, size = 0x4, offset = 0x4, fixed_abs, tag = 'smem constant byte address 0x4 - core index']
  #allocation1 [shape = 'u32[144,128]{1,0:T(1,128)}', space=vmem, size = 0x12000, scoped, tag = 'internal scratch']
  %s0 = inlined_call_operand.hbm [shape: f32[2,8], index: 0, kind: input, shape index: {}]
  %s1 = inlined_call_operand.hbm [shape: f32[8,8], index: 1, kind: input, shape index: {}]
  %s2 = inlined_call_operand.vmem [shape: f32[1,8], index: 2, kind: input, shape index: {}]
  %s3 = inlined_call_operand.vmem [shape: f32[8,16], index: 3, kind: input, shape index: {}]
  %s4 = inlined_call_operand.vmem [shape: f32[1,16], index: 4, kind: input, shape index: {}]
  %s5 = inlined_call_operand.hbm [shape: f32[2,16], index: 5, kind: output, shape index: {}]
  %s6 = sld [smem:[#allocation0]]
  $region38: #{tpu_custom_call.1} parent=0
    _
  %s8 = ssub.s32 1, %s6
  %s9 = scalar_select 0, %s8, %s6
  $region1: #{tpu_custom_call.1} parent=0
    #allocation2 [shape = 'u8[1024]{0}', space=vmem, size = 0x400, scoped, tag = 'input window, operand 0, single buffered']
    #allocation3 [shape = 's32[1]{0}', space=sflag, size = 0x4, scoped, tag = 'scoped memory for tpu_custom_call.1']
    #allocation4 [shape = 's32[1]{0}', space=sflag, size = 0x4, scoped, tag = 'scoped memory for tpu_custom_call.1']
    #allocation5 [shape = 'u8[4096]{0}', space=vmem, size = 0x1000, scoped, tag = 'input window, operand 1, single buffered']
    #allocation6 [shape = 's32[1]{0}', space=sflag, size = 0x4, scoped, tag = 'scoped memory for tpu_custom_call.1']
    #allocation7 [shape = 'u8[1024]{0}', space=vmem, size = 0x400, scoped, tag = 'output window, operand 0, single buffered']
    %10 = vsyncpa [#allocation3], 0
    %11 = vsyncpa [#allocation6], 0
    %12 = vsyncpa [#allocation4], 0
    // Predicated region
    $region2: #{tpu_custom_call.1} parent=1 // pred_check
      _
    $region3: #{tpu_custom_call.1} parent=1 // pred_check_branch
      %14 = sbr.rel (0) target = $region5
    $region4: #{tpu_custom_call.1} parent=1 // pred_region
      %s16 = ssub.s32 32, 32
      %17 = vsyncadd [#allocation3], %s16
      %s19 = sshll.u32 [#allocation2], 4
      %s20 = int_to_ptr.vmem [resolvable:$true] %s19
      %22 = dma.hbm_to_vmem [thread:$0]  %s0, 32, %s20, [#allocation3]
    $region5: #{tpu_custom_call.1} parent=1 // pred_fallthru
      _
    // Predicated region
    $region6: #{tpu_custom_call.1} parent=1 // pred_check
      _
    $region7: #{tpu_custom_call.1} parent=1 // pred_check_branch
      %24 = sbr.rel (0) target = $region9
    $region8: #{tpu_custom_call.1} parent=1 // pred_region
      %s26 = ssub.s32 128, 128
      %27 = vsyncadd [#allocation6], %s26
      %s29 = sshll.u32 [#allocation5], 4
      %s30 = int_to_ptr.vmem [resolvable:$true] %s29
      %32 = dma.hbm_to_vmem [thread:$0]  %s1, 128, %s30, [#allocation6]
    $region9: #{tpu_custom_call.1} parent=1 // pred_fallthru
      _
    // Predicated region
    $region10: #{tpu_custom_call.1} parent=1 // pred_check
      _
    $region11: #{tpu_custom_call.1} parent=1 // pred_check_branch
      %34 = sbr.rel (0) target = $region13
    $region12: #{tpu_custom_call.1} parent=1 // pred_region
      _
    $region13: #{tpu_custom_call.1} parent=1 // pred_fallthru
      _
    // Predicated region
    $region14: #{tpu_custom_call.1} parent=1 // pred_check
      _
    $region15: #{tpu_custom_call.1} parent=1 // pred_check_branch
      %36 = sbr.rel (0) target = $region17
    $region16: #{tpu_custom_call.1} parent=1 // pred_region
      _
    $region17: #{tpu_custom_call.1} parent=1 // pred_fallthru
      _
    // Predicated region
    $region18: #{tpu_custom_call.1} parent=1 // pred_check
      _
    $region19: #{tpu_custom_call.1} parent=1 // pred_check_branch
      %38 = sbr.rel (0) target = $region21
    $region20: #{tpu_custom_call.1} parent=1 // pred_region
      _
    $region21: #{tpu_custom_call.1} parent=1 // pred_fallthru
      _
    // Predicated region
    $region22: #{tpu_custom_call.1} parent=1 // pred_check
      _
    $region23: #{tpu_custom_call.1} parent=1 // pred_check_branch
      %40 = sbr.rel (0) target = $region25
    $region24: #{tpu_custom_call.1} parent=1 // pred_region
      %41 = dma.done [#allocation3], 32
    $region25: #{tpu_custom_call.1} parent=1 // pred_fallthru
      _
    // Predicated region
    $region26: #{tpu_custom_call.1} parent=1 // pred_check
      _
    $region27: #{tpu_custom_call.1} parent=1 // pred_check_branch
      %43 = sbr.rel (0) target = $region29
    $region28: #{tpu_custom_call.1} parent=1 // pred_region
      %44 = dma.done [#allocation6], 128
    $region29: #{tpu_custom_call.1} parent=1 // pred_fallthru
      _
    %v45 = vld [vmem:[#allocation2] sm:$0x3]
    %v46 = vld [vmem:[#allocation5] sm:$0xff]
    %v47 = vld [vmem:[%s2] sm:$0x1]
    %v49 = vlaneseq
    %v50 = vshrl.u32 %v49, 7
    %v51 = vsub.s32 0, %v50
    %v52 = vrot.slane %v47, %v51
    %vm54 = vcmask 64512
    %v56 = vsel %vm54, %v45, 0
    %58 = vmatprep.subr.mxu0 0.0
    %59 = vmatpush1.msra.mxu0 %v46
    %60 = vmatprep.subr.mxu0 0.0
    %61 = vmatpush1.msra.mxu0 0.0
    %62 = vmatprep.subr.mxu0 0.0
    %63 = vmatpush1.msra.mxu0 0.0
    %64 = vmatprep.subr.mxu0 0.0
    %65 = vmatpush1.msra.mxu0 0.0
    %66 = vmatprep.subr.mxu0 0.0
    %67 = vmatpush1.msra.mxu0 0.0
    %68 = vmatprep.subr.mxu0 0.0
    %69 = vmatpush1.msra.mxu0 0.0
    %70 = vmatprep.subr.mxu0 0.0
    %71 = vmatpush1.msra.mxu0 0.0
    %72 = vmatprep.subr.mxu0 0.0
    %73 = vmatpush1.msra.mxu0 0.0
    %74 = vmatprep.subr.mxu0 0.0
    %75 = vmatpush1.msra.mxu0 0.0
    %76 = vmatprep.subr.mxu0 0.0
    %77 = vmatpush1.msra.mxu0 0.0
    %78 = vmatprep.subr.mxu0 0.0
    %79 = vmatpush1.msra.mxu0 0.0
    %80 = vmatprep.subr.mxu0 0.0
    %81 = vmatpush1.msra.mxu0 0.0
    %82 = vmatprep.subr.mxu0 0.0
    %83 = vmatpush1.msra.mxu0 0.0
    %84 = vmatprep.subr.mxu0 0.0
    %85 = vmatpush1.msra.mxu0 0.0
    %86 = vmatprep.subr.mxu0 0.0
    %87 = vmatpush1.msra.mxu0 0.0
    %88 = vmatprep.subr.mxu0 0.0
    %89 = vmatpush1.msra.mxu0 0.0
    %90 = vmatprep.subr.mxu0 0.0
    %91 = vmatpush1.msra.mxu0 0.0
    %92 = vmatprep.subr.mxu0 0.0
    %93 = vmatpush1.msra.mxu0 0.0
    %94 = vmatprep.subr.mxu0 0.0
    %95 = vmatpush1.msra.mxu0 0.0
    %96 = vmatprep.subr.mxu0 0.0
    %97 = vmatpush1.msra.mxu0 0.0
    %98 = vmatprep.subr.mxu0 0.0
    %99 = vmatpush1.msra.mxu0 0.0
    %100 = vmatprep.subr.mxu0 0.0
    %101 = vmatpush1.msra.mxu0 0.0
    %102 = vmatprep.subr.mxu0 0.0
    %103 = vmatpush1.msra.mxu0 0.0
    %104 = vmatprep.subr.mxu0 0.0
    %105 = vmatpush1.msra.mxu0 0.0
    %106 = vmatprep.subr.mxu0 0.0
    %107 = vmatpush1.msra.mxu0 0.0
    %108 = vmatprep.subr.mxu0 0.0
    %109 = vmatpush1.msra.mxu0 0.0
    %110 = vmatprep.subr.mxu0 0.0
    %111 = vmatpush1.msra.mxu0 0.0
    %112 = vmatprep.subr.mxu0 0.0
    %113 = vmatpush1.msra.mxu0 0.0
    %114 = vmatprep.subr.mxu0 0.0
    %115 = vmatpush1.msra.mxu0 0.0
    %116 = vmatprep.subr.mxu0 0.0
    %117 = vmatpush1.msra.mxu0 0.0
    %118 = vmatprep.subr.mxu0 0.0
    %119 = vmatpush1.msra.mxu0 0.0
    %120 = vmatprep.subr.mxu0 0.0
    %121 = vmatpush1.msra.mxu0 0.0
    %122 = vmatprep.mubr.f32.mxu0 0.0
    %123 = vmatmul.mubr.f32.gmra.mrb[0].mxu0 %v56
    %v124 = vpop.f32.mrb[0].mxu0
    %v125 = vadd.f32 %v52, %v124
    %v126 = vpop.f32.mrb[0].mxu0
    %127 = vdwg.mxu0
    %v128 = vmax.f32 %v125, 0.0
    %v129 = vld [vmem:[%s3] sm:$0xff]
    %v130 = vld [vmem:[%s4] sm:$0x1]
    %v132 = vlaneseq
    %v133 = vshrl.u32 %v132, 7
    %v134 = vsub.s32 0, %v133
    %v135 = vrot.slane %v130, %v134
    %v138 = vsel %vm54, %v128, 0
    %140 = vmatprep.subr.mxu0 0.0
    %141 = vmatpush1.msra.mxu0 %v129
    %142 = vmatprep.subr.mxu0 0.0
    %143 = vmatpush1.msra.mxu0 0.0
    %144 = vmatprep.subr.mxu0 0.0
    %145 = vmatpush1.msra.mxu0 0.0
    %146 = vmatprep.subr.mxu0 0.0
    %147 = vmatpush1.msra.mxu0 0.0
    %148 = vmatprep.subr.mxu0 0.0
    %149 = vmatpush1.msra.mxu0 0.0
    %150 = vmatprep.subr.mxu0 0.0
    %151 = vmatpush1.msra.mxu0 0.0
    %152 = vmatprep.subr.mxu0 0.0
    %153 = vmatpush1.msra.mxu0 0.0
    %154 = vmatprep.subr.mxu0 0.0
    %155 = vmatpush1.msra.mxu0 0.0
    %156 = vmatprep.subr.mxu0 0.0
    %157 = vmatpush1.msra.mxu0 0.0
    %158 = vmatprep.subr.mxu0 0.0
    %159 = vmatpush1.msra.mxu0 0.0
    %160 = vmatprep.subr.mxu0 0.0
    %161 = vmatpush1.msra.mxu0 0.0
    %162 = vmatprep.subr.mxu0 0.0
    %163 = vmatpush1.msra.mxu0 0.0
    %164 = vmatprep.subr.mxu0 0.0
    %165 = vmatpush1.msra.mxu0 0.0
    %166 = vmatprep.subr.mxu0 0.0
    %167 = vmatpush1.msra.mxu0 0.0
    %168 = vmatprep.subr.mxu0 0.0
    %169 = vmatpush1.msra.mxu0 0.0
    %170 = vmatprep.subr.mxu0 0.0
    %171 = vmatpush1.msra.mxu0 0.0
    %172 = vmatprep.subr.mxu0 0.0
    %173 = vmatpush1.msra.mxu0 0.0
    %174 = vmatprep.subr.mxu0 0.0
    %175 = vmatpush1.msra.mxu0 0.0
    %176 = vmatprep.subr.mxu0 0.0
    %177 = vmatpush1.msra.mxu0 0.0
    %178 = vmatprep.subr.mxu0 0.0
    %179 = vmatpush1.msra.mxu0 0.0
    %180 = vmatprep.subr.mxu0 0.0
    %181 = vmatpush1.msra.mxu0 0.0
    %182 = vmatprep.subr.mxu0 0.0
    %183 = vmatpush1.msra.mxu0 0.0
    %184 = vmatprep.subr.mxu0 0.0
    %185 = vmatpush1.msra.mxu0 0.0
    %186 = vmatprep.subr.mxu0 0.0
    %187 = vmatpush1.msra.mxu0 0.0
    %188 = vmatprep.subr.mxu0 0.0
    %189 = vmatpush1.msra.mxu0 0.0
    %190 = vmatprep.subr.mxu0 0.0
    %191 = vmatpush1.msra.mxu0 0.0
    %192 = vmatprep.subr.mxu0 0.0
    %193 = vmatpush1.msra.mxu0 0.0
    %194 = vmatprep.subr.mxu0 0.0
    %195 = vmatpush1.msra.mxu0 0.0
    %196 = vmatprep.subr.mxu0 0.0
    %197 = vmatpush1.msra.mxu0 0.0
    %198 = vmatprep.subr.mxu0 0.0
    %199 = vmatpush1.msra.mxu0 0.0
    %200 = vmatprep.subr.mxu0 0.0
    %201 = vmatpush1.msra.mxu0 0.0
    %202 = vmatprep.subr.mxu0 0.0
    %203 = vmatpush1.msra.mxu0 0.0
    %204 = vmatprep.mubr.f32.mxu0 0.0
    %205 = vmatmul.mubr.f32.gmra.mrb[0].mxu0 %v138
    %v206 = vpop.f32.mrb[0].mxu0
    %v207 = vadd.f32 %v135, %v206
    %v208 = vpop.f32.mrb[0].mxu0
    %209 = vdwg.mxu0
    %v210 = vxor.u32 %v207, 2147483648
    %v211 = vmul.f32 %v210, 1.442695
    %v212 = vpow.pop %v211
    %v213 = vadd.f32 %v212, 1.0
    %v214 = vrcp.pop %v213
    %v215 = vmul.f32 1.0, %v214
    %vm216 = vcmask 123904
    %217 = vst.msk [vmem:[#allocation7] sm:$0x3] %vm216, %v215
    // Predicated region
    $region30: #{tpu_custom_call.1} parent=1 // pred_check
      _
    $region31: #{tpu_custom_call.1} parent=1 // pred_check_branch
      %219 = sbr.rel (0) target = $region33
    $region32: #{tpu_custom_call.1} parent=1 // pred_region
      %s221 = ssub.s32 32, 32
      %222 = vsyncadd [#allocation4], %s221
      %s224 = sshll.u32 [#allocation7], 4
      %s225 = int_to_ptr.vmem [resolvable:$true] %s224
      %227 = dma.vmem_to_hbm [thread:$0]  %s225, 32, %s5, [#allocation4]
    $region33: #{tpu_custom_call.1} parent=1 // pred_fallthru
      _
    // Predicated region
    $region34: #{tpu_custom_call.1} parent=1 // pred_check
      _
    $region35: #{tpu_custom_call.1} parent=1 // pred_check_branch
      %229 = sbr.rel (0) target = $region37
    $region36: #{tpu_custom_call.1} parent=1 // pred_region
      %230 = dma.done [#allocation4], 32
    $region37: #{tpu_custom_call.1} parent=1 // pred_fallthru
      _
    %231 = vsyncpa [#allocation3], 1
    %232 = vsyncpa [#allocation6], 1
    %233 = vsyncpa [#allocation4], 1

</llo_original>
